<compile_context>
chip_gen: v5e
topology: v5e:2x2
jax: 0.10.0
libtpu: 0.0.40
codegen_flags: <defaults>
</compile_context>

<pallas_src>
import math
from functools import lru_cache

import jax
import jax.numpy as jnp
from jax.experimental import pallas as pl
from jax.experimental.pallas import tpu as pltpu


def _round_up(x, m):
    return ((x + m - 1) // m) * m


def _pick_best(d, cands):
    """Pick the candidate tile minimizing padded size; tie -> larger tile."""
    best_c = cands[-1]
    best_p = _round_up(d, best_c)
    for c in cands:
        p = _round_up(d, c)
        if p < best_p or (p == best_p and c > best_c):
            best_c, best_p = c, p
    return best_c


def _tk_for(K):
    return _pick_best(K, (1024, 768, 512, 384, 256, 128))


def _tn_for(N):
    return _pick_best(N, (512, 384, 256, 128))


def _tm_for(M):
    if M > 128:
        return _pick_best(M, (512, 256, 128))
    return _round_up(max(M, 1), 16)


# ----------------------------------------------------------------------------
# Pallas GEMM kernels (bf16 operands, f32 VMEM accumulation)
# ----------------------------------------------------------------------------

def _matmul_bias_kernel(a_ref, b_ref, bias_ref, o_ref, acc_ref):
    k = pl.program_id(2)

    @pl.when(k == 0)
    def _():
        acc_ref[...] = jnp.zeros_like(acc_ref)

    acc_ref[...] += jnp.dot(a_ref[...], b_ref[...],
                            preferred_element_type=jnp.float32)

    @pl.when(k == pl.num_programs(2) - 1)
    def _():
        o_ref[...] = (acc_ref[...] + bias_ref[...]).astype(o_ref.dtype)


def _matmul_bias_stats_kernel(a_ref, b_ref, bias_ref, o_ref, sum_ref, sq_ref,
                              acc_ref):
    k = pl.program_id(2)

    @pl.when(k == 0)
    def _():
        acc_ref[...] = jnp.zeros_like(acc_ref)

    acc_ref[...] += jnp.dot(a_ref[...], b_ref[...],
                            preferred_element_type=jnp.float32)

    @pl.when(k == pl.num_programs(2) - 1)
    def _():
        r = acc_ref[...] + bias_ref[...]
        o_ref[...] = r.astype(o_ref.dtype)
        # fused BatchNorm statistics: per-channel partial sums for this row-tile
        sum_ref[...] = jnp.sum(r, axis=0)[None, None, :]
        sq_ref[...] = jnp.sum(r * r, axis=0)[None, None, :]


@lru_cache(maxsize=None)
def _get_matmul_fn(Mp, Kp, Np, tm, tn, tk, out_dtype, stats):
    gi_blocks = Mp // tm
    in_specs = [
        pl.BlockSpec((tm, tk), lambda i, j, k: (i, k)),
        pl.BlockSpec((tk, tn), lambda i, j, k: (k, j)),
        pl.BlockSpec((1, tn), lambda i, j, k: (0, j)),
    ]
    if stats:
        kernel = _matmul_bias_stats_kernel
        out_specs = [
            pl.BlockSpec((tm, tn), lambda i, j, k: (i, j)),
            pl.BlockSpec((1, 1, tn), lambda i, j, k: (i, 0, j)),
            pl.BlockSpec((1, 1, tn), lambda i, j, k: (i, 0, j)),
        ]
        out_shape = (jax.ShapeDtypeStruct((Mp, Np), out_dtype),
                     jax.ShapeDtypeStruct((gi_blocks, 1, Np), jnp.float32),
                     jax.ShapeDtypeStruct((gi_blocks, 1, Np), jnp.float32))
    else:
        kernel = _matmul_bias_kernel
        out_specs = pl.BlockSpec((tm, tn), lambda i, j, k: (i, j))
        out_shape = jax.ShapeDtypeStruct((Mp, Np), out_dtype)

    grid_spec = pltpu.PrefetchScalarGridSpec(
        num_scalar_prefetch=0,
        grid=(Mp // tm, Np // tn, Kp // tk),
        in_specs=in_specs,
        out_specs=out_specs,
        scratch_shapes=[pltpu.VMEM((tm, tn), jnp.float32)],
    )
    f = pl.pallas_call(
        kernel,
        out_shape=out_shape,
        grid_spec=grid_spec,
        compiler_params=pltpu.CompilerParams(
            dimension_semantics=("parallel", "parallel", "arbitrary"),
            vmem_limit_bytes=64 * 1024 * 1024),   # raise v5e's 16 MiB default
    )
    return jax.jit(f)


def pallas_matmul(a, b, bias=None, *, n=None, out_dtype=jnp.float32,
                  compute_stats=False):
    """a: (M, K), b: (K, N) or pre-padded (Kp, Np) bf16, bias: (N,) or None.

    Returns (M, N) in out_dtype; with compute_stats also returns per-column
    sum and sum-of-squares (for fused training-mode BatchNorm statistics).
    """
    M, K = a.shape
    N = int(n) if n is not None else int(b.shape[1])
    tk = _tk_for(K)
    Kp = _round_up(K, tk)
    tn = _tn_for(N)
    Np = _round_up(N, tn)
    tm = _tm_for(M)
    Mp = _round_up(M, tm)
    # v7x megacore: guarantee >=2 blocks along a 'parallel' axis when possible.
    if (Mp // tm) == 1 and (Np // tn) == 1:
        if tm >= 16 and tm % 16 == 0:
            tm //= 2
        elif tn % 256 == 0:
            tn //= 2

    a_p = jnp.pad(a.astype(jnp.bfloat16), ((0, Mp - M), (0, Kp - K)))
    if b.shape == (Kp, Np):
        b_p = b.astype(jnp.bfloat16)          # pre-padded weight: no-op
    else:
        b_p = jnp.pad(b.astype(jnp.bfloat16), ((0, Kp - K), (0, Np - N)))
    if bias is None:
        bias_p = jnp.zeros((1, Np), jnp.float32)
    else:
        bias_p = jnp.pad(bias.astype(jnp.float32), (0, Np - N)).reshape(1, Np)

    fn = _get_matmul_fn(Mp, Kp, Np, tm, tn, tk, out_dtype, compute_stats)
    res = fn(a_p, b_p, bias_p)
    if compute_stats:
        out, s1, s2 = res
        return out[:M, :N], s1[:, 0, :N].sum(0), s2[:, 0, :N].sum(0)
    return res[:M, :N]


def _prep_weight(w_kn):
    """Pre-pad + pre-cast a (K, N) weight to the (Kp, Np) bf16 layout."""
    K, N = w_kn.shape
    Kp = _round_up(K, _tk_for(K))
    Np = _round_up(N, _tn_for(N))
    return jnp.pad(w_kn, ((0, Kp - K), (0, Np - N))).astype(jnp.bfloat16)


# ----------------------------------------------------------------------------
# Pallas GRU recurrence kernel (one layer; input projection hoisted outside)
# ----------------------------------------------------------------------------

def _gru_layer_kernel(h0_ref, gi_ref, whh_ref, bhh_ref,
                      hseq_ref, hfin_ref, h_sc):
    g = pl.program_id(0)
    B, D = h0_ref.shape
    TT = gi_ref.shape[0] // B

    @pl.when(g == 0)
    def _():
        h_sc[...] = h0_ref[...]

    whh = whh_ref[...]            # bf16, resident across the unrolled loop
    bhh = bhh_ref[...]

    def step(i, h):
        gi = gi_ref[pl.ds(i * B, B), :]                     # (B, 3D) f32
        gh = jnp.dot(h.astype(jnp.bfloat16), whh,
                     preferred_element_type=jnp.float32) + bhh
        r = jax.nn.sigmoid(gi[:, :D] + gh[:, :D])
        z = jax.nn.sigmoid(gi[:, D:2 * D] + gh[:, D:2 * D])
        nn_ = jnp.tanh(gi[:, 2 * D:] + r * gh[:, 2 * D:])
        h_new = (1.0 - z) * nn_ + z * h
        hseq_ref[pl.ds(i * B, B), :] = h_new.astype(hseq_ref.dtype)
        return h_new

    h_last = jax.lax.fori_loop(0, TT, step, h_sc[...], unroll=True)
    h_sc[...] = h_last

    @pl.when(g == pl.num_programs(0) - 1)
    def _():
        hfin_ref[...] = h_last


@lru_cache(maxsize=None)
def _get_gru_layer_fn(T, B, D, TT):
    G = T // TT
    R = TT * B                                   # folded (timestep, batch) rows
    grid_spec = pltpu.PrefetchScalarGridSpec(
        num_scalar_prefetch=0,
        grid=(G,),
        in_specs=[
            pl.BlockSpec((B, D), lambda g: (0, 0)),           # h0
            pl.BlockSpec((R, 3 * D), lambda g: (g, 0)),       # precomputed gates
            pl.BlockSpec((D, 3 * D), lambda g: (0, 0)),       # Whh (bf16)
            pl.BlockSpec((1, 3 * D), lambda g: (0, 0)),       # bhh
        ],
        out_specs=[
            pl.BlockSpec((R, D), lambda g: (g, 0)),           # hidden sequence
            pl.BlockSpec((B, D), lambda g: (0, 0)),           # final hidden
        ],
        scratch_shapes=[pltpu.VMEM((B, D), jnp.float32)],
    )
    f = pl.pallas_call(
        _gru_layer_kernel,
        out_shape=(jax.ShapeDtypeStruct((T * B, D), jnp.bfloat16),
                   jax.ShapeDtypeStruct((B, D), jnp.float32)),
        grid_spec=grid_spec,
        compiler_params=pltpu.CompilerParams(dimension_semantics=("arbitrary",)),
    )
    return jax.jit(f)


def _pick_tt(T, B, max_tt=32):
    for tt in range(min(T, max_tt), 0, -1):
        if T % tt == 0 and (tt == T or (tt * B) % 8 == 0):
            return tt
    return T


def pallas_gru2(fx_btd, h0, gru_params):
    """2-layer batch-first GRU (torch nn.GRU semantics, gate order r,z,n)."""
    B, T, D = fx_btd.shape
    if h0 is None:
        h0 = jnp.zeros((len(gru_params), B, D), jnp.float32)
    # rows in (t-major, b-minor) order so TT*B consecutive rows form one block
    x_flat = jnp.transpose(fx_btd, (1, 0, 2)).reshape(T * B, D)
    TT = _pick_tt(T, B)
    layer_in = x_flat
    finals = []
    for l, p in enumerate(gru_params):
        # Hoisted (non-recurrent) input projection as one big GEMM: (T*B,D)x(D,3D)
        gi = pallas_matmul(layer_in, p['wih'], p['bih'], n=3 * D)
        hseq, hfin = _get_gru_layer_fn(T, B, D, TT)(
            h0[l].astype(jnp.float32), gi, p['whh'], p['bhh'])
        layer_in = hseq                                    # bf16 (T*B, D)
        finals.append(hfin)
    Hx = jnp.transpose(layer_in.reshape(T, B, D), (1, 0, 2))
    return Hx, jnp.stack(finals, axis=0)


# ----------------------------------------------------------------------------
# Pallas MSE reduction (lane-dense 2D layout)
# ----------------------------------------------------------------------------

def _mse_sum_kernel(a_ref, b_ref, o_ref):
    d = a_ref[...] - b_ref[...]
    o_ref[0, 0] = jnp.sum(d * d)


@lru_cache(maxsize=None)
def _get_mse_fn(rows):
    f = pl.pallas_call(
        _mse_sum_kernel,
        out_shape=jax.ShapeDtypeStruct((1, 1), jnp.float32),
        in_specs=[pl.BlockSpec(memory_space=pltpu.MemorySpace.VMEM)] * 2,
        out_specs=pl.BlockSpec(memory_space=pltpu.MemorySpace.SMEM),
    )
    return jax.jit(f)


def pallas_mse(a, b):
    a = a.reshape(-1).astype(jnp.float32)
    b = b.reshape(-1).astype(jnp.float32)
    n = a.shape[0]
    npad = _round_up(n, 8 * 128)
    a2 = jnp.pad(a, (0, npad - n)).reshape(npad // 128, 128)
    b2 = jnp.pad(b, (0, npad - n)).reshape(npad // 128, 128)
    s = _get_mse_fn(a2.shape[0])(a2, b2)
    return s[0, 0] / n


# ----------------------------------------------------------------------------
# ResNet-34 backbone, NHWC end to end, bf16 activations, fused BN stats
# ----------------------------------------------------------------------------

def conv2d_pallas(x, wmat, n_out, kh, kw, stride, padding, stats=False):
    """x: (N,H,W,C) NHWC, wmat pre-padded (Kp,Np) bf16 -> (N,OH,OW,n_out) bf16."""
    x = x.astype(jnp.bfloat16)                 # halve im2col HBM traffic
    N = x.shape[0]
    if kh == 1 and kw == 1 and padding == 0:
        xs = x[:, ::stride, ::stride, :]       # skip patch materialization
        _, OH, OW, C = xs.shape
        cols = xs.reshape(N * OH * OW, C)
    else:
        patches = jax.lax.conv_general_dilated_patches(
            x, filter_shape=(kh, kw), window_strides=(stride, stride),
            padding=((padding, padding), (padding, padding)),
            dimension_numbers=('NHWC', 'OIHW', 'NHWC'))  # features (C, kh, kw)
        _, OH, OW, F = patches.shape
        cols = patches.reshape(N * OH * OW, F)
    res = pallas_matmul(cols, wmat, n=n_out, out_dtype=jnp.bfloat16,
                        compute_stats=stats)
    if stats:
        out, csum, csq = res
        return out.reshape(N, OH, OW, n_out), csum, csq
    return res.reshape(N, OH, OW, n_out)


def _conv_bn(x, wmat, n_out, kh, kw, stride, padding, gamma, beta,
             relu=True, eps=1e-5):
    """Conv (no bias) + training-mode BN (stats fused in GEMM epilogue) + ReLU."""
    out, csum, csq = conv2d_pallas(x, wmat, n_out, kh, kw, stride, padding,
                                   stats=True)
    cnt = out.shape[0] * out.shape[1] * out.shape[2]
    mean = csum / cnt
    var = jnp.maximum(csq / cnt - mean * mean, 0.0)
    scale = gamma * jax.lax.rsqrt(var + eps)
    shift = beta - mean * scale
    y = out.astype(jnp.float32) * scale + shift           # one fused pass
    if relu:
        y = jnp.maximum(y, 0.0)
    return y.astype(jnp.bfloat16)


def maxpool2d_nhwc(x, k=3, s=2, p=1):
    init = jnp.array(-jnp.inf, dtype=x.dtype)
    return jax.lax.reduce_window(
        x, init, jax.lax.max,
        (1, k, k, 1), (1, s, s, 1),
        ((0, 0), (p, p), (p, p), (0, 0)))


def resnet34_forward(p, x, out_dim):
    x = _conv_bn(x, p['conv1_w'], 64, 7, 7, 2, 3, *p['bn1'])
    x = maxpool2d_nhwc(x)
    for li, (blocks, ch) in enumerate(zip(p['layers'], (64, 128, 256, 512))):
        for bi, blk in enumerate(blocks):
            s = 2 if (li > 0 and bi == 0) else 1
            identity = x
            out = _conv_bn(x, blk['conv1_w'], ch, 3, 3, s, 1, *blk['bn1'])
            out = _conv_bn(out, blk['conv2_w'], ch, 3, 3, 1, 1, *blk['bn2'],
                           relu=False)
            if 'down_w' in blk:
                identity = _conv_bn(identity, blk['down_w'], ch, 1, 1, s, 0,
                                    *blk['down_bn'], relu=False)
            x = jnp.maximum(out + identity, 0.0).astype(jnp.bfloat16)
    x = jnp.mean(x.astype(jnp.float32), axis=(1, 2))       # AdaptiveAvgPool2d
    return pallas_matmul(x, p['fc_w'], p['fc_b'], n=out_dim)  # encoder.fc


# ----------------------------------------------------------------------------
# Deterministic parameter initialization
# ----------------------------------------------------------------------------

class KeyGen:
    def __init__(self, key):
        self.key = key
        self.i = 0

    def __call__(self):
        self.i += 1
        return jax.random.fold_in(self.key, self.i)


def _conv_init(key, O, C, kh, kw):
    fan_out = O * kh * kw
    w = jax.random.normal(key, (O, C, kh, kw), jnp.float32) * math.sqrt(2.0 / fan_out)
    # pre-reshape + pre-transpose + pre-pad + bf16-cast once (reused every call)
    return _prep_weight(w.reshape(O, C * kh * kw).T)


def _bn_init(ch):
    return (jnp.ones((ch,), jnp.float32), jnp.zeros((ch,), jnp.float32))


def init_resnet34(kg, out_dim):
    p = {'conv1_w': _conv_init(kg(), 64, 3, 7, 7), 'bn1': _bn_init(64)}
    layers = []
    in_ch = 64
    for li, (n_blocks, ch) in enumerate(zip([3, 4, 6, 3], [64, 128, 256, 512])):
        blocks = []
        for b in range(n_blocks):
            s = 2 if (li > 0 and b == 0) else 1
            blk = {'conv1_w': _conv_init(kg(), ch, in_ch, 3, 3),
                   'bn1': _bn_init(ch),
                   'conv2_w': _conv_init(kg(), ch, ch, 3, 3),
                   'bn2': _bn_init(ch)}
            if s != 1 or in_ch != ch:
                blk['down_w'] = _conv_init(kg(), ch, in_ch, 1, 1)
                blk['down_bn'] = _bn_init(ch)
            blocks.append(blk)
            in_ch = ch
        layers.append(blocks)
    p['layers'] = layers
    # encoder.fc replaced by Linear(512, rnn_hdim), init N(0, 0.01), bias 0
    p['fc_w'] = _prep_weight(0.01 * jax.random.normal(kg(), (512, out_dim),
                                                      jnp.float32))
    p['fc_b'] = jnp.zeros((out_dim,), jnp.float32)
    return p


def init_gru(kg, input_size, hidden, num_layers=2):
    layers = []
    k = 1.0 / math.sqrt(hidden)
    for l in range(num_layers):
        isz = input_size if l == 0 else hidden
        wih = jax.random.uniform(kg(), (3 * hidden, isz), jnp.float32, -k, k)
        whh = jax.random.uniform(kg(), (3 * hidden, hidden), jnp.float32, -k, k)
        bih = jax.random.uniform(kg(), (3 * hidden,), jnp.float32, -k, k)
        bhh = jax.random.uniform(kg(), (3 * hidden,), jnp.float32, -k, k)
        layers.append(dict(wih=_prep_weight(wih.T),
                           whh=whh.T.astype(jnp.bfloat16),
                           bih=bih,
                           bhh=bhh.reshape(1, -1)))
    return layers


# ----------------------------------------------------------------------------
# C_Net forward
# ----------------------------------------------------------------------------

def c_net_forward(params, I, x_gt, warmup_frames, rnn_hdim=128):
    B, T_total = x_gt.shape[:2]
    C, H, W = I.shape[1], I.shape[3], I.shape[4]
    T = T_total - warmup_frames
    I = I.astype(jnp.float32)

    # --- warm_up(): warmup_encoder -> warmup_rnn, take final hidden state hx ---
    warmup_I = I[:, :, :warmup_frames]                                    # (B,C,Tw,H,W)
    main_I = I[:, :, warmup_frames:]
    w_imgs = jnp.transpose(warmup_I, (0, 2, 3, 4, 1)).reshape(
        B * warmup_frames, H, W, C)                                       # NHWC
    wfx = resnet34_forward(params['warmup_encoder'], w_imgs, rnn_hdim)
    wfx = wfx.reshape(B, warmup_frames, rnn_hdim)
    _, hx = pallas_gru2(wfx, None, params['warmup_rnn'])                  # (2,B,D)

    # --- main encoder + rnn ---
    m_imgs = jnp.transpose(main_I, (0, 2, 3, 4, 1)).reshape(B * T, H, W, C)
    fx = resnet34_forward(params['encoder'], m_imgs, rnn_hdim).reshape(B, T, rnn_hdim)
    Hx, _ = pallas_gru2(fx, hx, params['rnn'])                            # (B,T,D) bf16

    # --- decoder ---
    # TODO(synk): `self.decoder` is not defined in the provided source; assumed
    # Linear(rnn_hdim, 2) + Sigmoid (C_Net activation). Kept in plain JAX: N=2
    # padded to 128 lanes would waste >98% of the MXU.
    dec = Hx.astype(jnp.float32).reshape(B * T, rnn_hdim) @ params['dec_w'] \
        + params['dec_b']
    x_pred = jax.nn.sigmoid(dec).reshape(B, T, 2)

    # --- losses ---
    x_gt_s = x_gt[:, warmup_frames:].astype(jnp.float32)
    loss_x = pallas_mse(x_pred, x_gt_s)                                   # MSE, mean
    # compute_v_loss reproduced verbatim from source: the slice is along the batch
    # axis and v_gt = x_gt[1:] - x_gt[1:] == 0 (flagged, but kept for fidelity).
    v_pred = x_pred[1:, :] - x_pred[:-1, :]
    v_gt = x_gt_s[1:, :] - x_gt_s[1:, :]
    loss_v = pallas_mse(v_pred, v_gt)
    return (loss_x, loss_v), x_pred


# ----------------------------------------------------------------------------
# Main
# ----------------------------------------------------------------------------

if __name__ == "__main__":
    key = jax.random.PRNGKey(0)
    kg = KeyGen(key)

    RNN_HDIM = 128                              # module asserts rnn_hdim == 128
    B, C, T_TOTAL, H, W = 2, 3, 4, 16, 16
    WARMUP = 2                                  # small stand-in for warm_up=32

    params = {
        'encoder': init_resnet34(kg, RNN_HDIM),
        'warmup_encoder': init_resnet34(kg, RNN_HDIM),
        'rnn': init_gru(kg, RNN_HDIM, RNN_HDIM, 2),
        'warmup_rnn': init_gru(kg, RNN_HDIM, RNN_HDIM, 2),
        'dec_w': 0.01 * jax.random.normal(kg(), (RNN_HDIM, 2), jnp.float32),
        'dec_b': jnp.zeros((2,), jnp.float32),
    }

    I = jax.random.normal(jax.random.fold_in(key, 10_000),
                          (B, C, T_TOTAL, H, W), jnp.float32)
    x_gt = jax.random.uniform(jax.random.fold_in(key, 10_001),
                              (B, T_TOTAL, 2), jnp.float32)

    fwd = jax.jit(c_net_forward, static_argnums=(3, 4))
    (loss_x, loss_v), x_pred = fwd(params, I, x_gt, WARMUP, RNN_HDIM)
    jax.block_until_ready((loss_x, loss_v, x_pred))
    assert x_pred.shape == (B, T_TOTAL - WARMUP, 2)
    print("KERNEL_OK")
</pallas_src>

<mosaic_0001>
module attributes {stable_mosaic.version = 11 : i64} {
  func.func @_matmul_bias_stats_kernel(%arg0: i32, %arg1: i32, %arg2: i32, %arg3: memref<128x256xbf16, #tpu.memory_space<vmem>>, %arg4: memref<256x128xbf16, #tpu.memory_space<vmem>>, %arg5: memref<1x128xf32, #tpu.memory_space<vmem>>, %arg6: memref<128x128xbf16, #tpu.memory_space<vmem>>, %arg7: memref<1x1x128xf32, #tpu.memory_space<vmem>>, %arg8: memref<1x1x128xf32, #tpu.memory_space<vmem>>, %arg9: memref<128x128xf32, #tpu.memory_space<vmem>>) attributes {dimension_semantics = [#tpu.dimension_semantics<parallel>, #tpu.dimension_semantics<parallel>, #tpu.dimension_semantics<arbitrary>], iteration_bounds = array<i64: 2, 1, 1>, scalar_prefetch = 0 : i64, scratch_operands = 1 : i64, tpu.core_type = #tpu.core_type<tc>, window_params = [{transform_indices = @transform_0, window_bounds = array<i64: 128, 256>}, {transform_indices = @transform_1, window_bounds = array<i64: 256, 128>}, {transform_indices = @transform_2, window_bounds = array<i64: 1, 128>}, {transform_indices = @transform_3, window_bounds = array<i64: 128, 128>}, {transform_indices = @transform_4, window_bounds = array<i64: 1, 1, 128>}, {transform_indices = @transform_5, window_bounds = array<i64: 1, 1, 128>}]} {
    %c0_i32 = arith.constant 0 : i32
    %0 = arith.cmpi eq, %arg2, %c0_i32 : i32
    %1 = arith.extui %0 : i1 to i32
    %c0_i32_0 = arith.constant 0 : i32
    %2 = arith.cmpi ne, %1, %c0_i32_0 : i32
    scf.if %2 {
      %cst_10 = arith.constant 0.000000e+00 : f32
      %12 = vector.broadcast %cst_10 : f32 to vector<128x128xf32>
      %c0_11 = arith.constant 0 : index
      %c0_12 = arith.constant 0 : index
      %13 = vector.load %arg9[%c0_11, %c0_12] : memref<128x128xf32, #tpu.memory_space<vmem>>, vector<128x128xf32>
      tpu.vector_store %arg9[%c0_11, %c0_12], %12 {strides = array<i32>} : memref<128x128xf32, #tpu.memory_space<vmem>>, vector<128x128xf32>,
    } else {
    }
    %c0 = arith.constant 0 : index
    %c0_1 = arith.constant 0 : index
    %3 = vector.load %arg9[%c0, %c0_1] : memref<128x128xf32, #tpu.memory_space<vmem>>, vector<128x128xf32>
    %c0_2 = arith.constant 0 : index
    %c0_3 = arith.constant 0 : index
    %4 = vector.load %arg3[%c0_2, %c0_3] : memref<128x256xbf16, #tpu.memory_space<vmem>>, vector<128x256xbf16>
    %c0_4 = arith.constant 0 : index
    %c0_5 = arith.constant 0 : index
    %5 = vector.load %arg4[%c0_4, %c0_5] : memref<256x128xbf16, #tpu.memory_space<vmem>>, vector<256x128xbf16>
    %cst = arith.constant dense<0.000000e+00> : vector<128x128xf32>
    %6 = tpu.matmul %4, %5, %cst {dimension_numbers = #tpu.dot_dimension_numbers<[1], [0], [0], [1], [0, 0, 1, 1], [], []>} : vector<128x256xbf16>, vector<256x128xbf16>, vector<128x128xf32> -> vector<128x128xf32>
    %7 = arith.addf %3, %6 : vector<128x128xf32>
    %c0_6 = arith.constant 0 : index
    %c0_7 = arith.constant 0 : index
    %8 = vector.load %arg9[%c0_6, %c0_7] : memref<128x128xf32, #tpu.memory_space<vmem>>, vector<128x128xf32>
    tpu.vector_store %arg9[%c0_6, %c0_7], %7 {strides = array<i32>} : memref<128x128xf32, #tpu.memory_space<vmem>>, vector<128x128xf32>,
    %c0_i32_8 = arith.constant 0 : i32
    %9 = arith.cmpi eq, %arg2, %c0_i32_8 : i32
    %10 = arith.extui %9 : i1 to i32
    %c0_i32_9 = arith.constant 0 : i32
    %11 = arith.cmpi ne, %10, %c0_i32_9 : i32
    scf.if %11 {
      %c0_10 = arith.constant 0 : index
      %c0_11 = arith.constant 0 : index
      %12 = vector.load %arg9[%c0_10, %c0_11] : memref<128x128xf32, #tpu.memory_space<vmem>>, vector<128x128xf32>
      %c0_12 = arith.constant 0 : index
      %c0_13 = arith.constant 0 : index
      %13 = vector.load %arg5[%c0_12, %c0_13] : memref<1x128xf32, #tpu.memory_space<vmem>>, vector<1x128xf32>
      %14 = vector.broadcast %13 : vector<1x128xf32> to vector<128x128xf32>
      %15 = arith.addf %12, %14 : vector<128x128xf32>
      %16 = arith.truncf %15 : vector<128x128xf32> to vector<128x128xbf16>
      %c0_14 = arith.constant 0 : index
      %c0_15 = arith.constant 0 : index
      %17 = vector.load %arg6[%c0_14, %c0_15] : memref<128x128xbf16, #tpu.memory_space<vmem>>, vector<128x128xbf16>
      tpu.vector_store %arg6[%c0_14, %c0_15], %16 {strides = array<i32>} : memref<128x128xbf16, #tpu.memory_space<vmem>>, vector<128x128xbf16>,
      %cst_16 = arith.constant dense<0.000000e+00> : vector<128xf32>
      %18 = vector.multi_reduction <add>, %15, %cst_16 [0] : vector<128x128xf32> to vector<128xf32>
      %19 = vector.shape_cast %18 : vector<128xf32> to vector<1x1x128xf32>
      %c0_17 = arith.constant 0 : index
      %c0_18 = arith.constant 0 : index
      %c0_19 = arith.constant 0 : index
      %20 = vector.load %arg7[%c0_17, %c0_18, %c0_19] : memref<1x1x128xf32, #tpu.memory_space<vmem>>, vector<1x1x128xf32>
      tpu.vector_store %arg7[%c0_17, %c0_18, %c0_19], %19 {strides = array<i32>} : memref<1x1x128xf32, #tpu.memory_space<vmem>>, vector<1x1x128xf32>,
      %21 = arith.mulf %15, %15 : vector<128x128xf32>
      %cst_20 = arith.constant dense<0.000000e+00> : vector<128xf32>
      %22 = vector.multi_reduction <add>, %21, %cst_20 [0] : vector<128x128xf32> to vector<128xf32>
      %23 = vector.shape_cast %22 : vector<128xf32> to vector<1x1x128xf32>
      %c0_21 = arith.constant 0 : index
      %c0_22 = arith.constant 0 : index
      %c0_23 = arith.constant 0 : index
      %24 = vector.load %arg8[%c0_21, %c0_22, %c0_23] : memref<1x1x128xf32, #tpu.memory_space<vmem>>, vector<1x1x128xf32>
      tpu.vector_store %arg8[%c0_21, %c0_22, %c0_23], %23 {strides = array<i32>} : memref<1x1x128xf32, #tpu.memory_space<vmem>>, vector<1x1x128xf32>,
    } else {
    }
    return
  }
  func.func @transform_0(%arg0: i32, %arg1: i32, %arg2: i32) -> (i32, i32) {
    %c0_i32 = arith.constant 0 : i32
    return %arg0, %arg2 : i32, i32
  }
  func.func @transform_1(%arg0: i32, %arg1: i32, %arg2: i32) -> (i32, i32) {
    %c0_i32 = arith.constant 0 : i32
    return %arg2, %arg1 : i32, i32
  }
  func.func @transform_2(%arg0: i32, %arg1: i32, %arg2: i32) -> (i32, i32) {
    %c0_i32 = arith.constant 0 : i32
    %c0_i32_0 = arith.constant 0 : i32
    return %c0_i32, %arg1 : i32, i32
  }
  func.func @transform_3(%arg0: i32, %arg1: i32, %arg2: i32) -> (i32, i32) {
    %c0_i32 = arith.constant 0 : i32
    return %arg0, %arg1 : i32, i32
  }
  func.func @transform_4(%arg0: i32, %arg1: i32, %arg2: i32) -> (i32, i32, i32) {
    %c0_i32 = arith.constant 0 : i32
    %c0_i32_0 = arith.constant 0 : i32
    return %arg0, %c0_i32, %arg1 : i32, i32, i32
  }
  func.func @transform_5(%arg0: i32, %arg1: i32, %arg2: i32) -> (i32, i32, i32) {
    %c0_i32 = arith.constant 0 : i32
    %c0_i32_0 = arith.constant 0 : i32
    return %arg0, %c0_i32, %arg1 : i32, i32, i32
  }
}

</mosaic_0001>

<llo_original>
// kernel: tpu_custom_call.1
$region0: #{tpu_custom_call.1}
  #allocation0 [shape = 'u32[]', space=smem, size = 0x4, offset = 0x4, fixed_abs, tag = 'smem constant byte address 0x4 - core index']
  #allocation1 [shape = 'u32[72,128]{1,0:T(1,128)}', space=vmem, size = 0x9000, scoped, tag = 'internal scratch']
  #allocation2 [shape = 'f32[128,128]{1,0:T(8,128)}', space=vmem, size = 0x10000, scoped, tag = 'scratch operand']
  %s0 = inlined_call_operand.hbm [shape: bf16[256,256], index: 0, kind: input, shape index: {}]
  %s1 = inlined_call_operand.hbm [shape: bf16[256,128], index: 1, kind: input, shape index: {}]
  %s2 = inlined_call_operand.vmem [shape: f32[1,128], index: 2, kind: input, shape index: {}]
  %s3 = inlined_call_operand.hbm [shape: bf16[256,128], index: 3, kind: output, shape index: {0}]
  %s4 = inlined_call_operand.hbm [shape: f32[2,1,128], index: 4, kind: output, shape index: {1}]
  %s5 = inlined_call_operand.hbm [shape: f32[2,1,128], index: 5, kind: output, shape index: {2}]
  %6 = xla_tuple %s3, %s4, %s5
  %s7 = sld [smem:[#allocation0]]
  $region77: #{tpu_custom_call.1} parent=0
    _
  %s9 = ssub.s32 1, %s7
  %s10 = scalar_select 0, %s9, %s7
  $region1: #{tpu_custom_call.1} parent=0
    #allocation3 [shape = 'u8[131072]{0}', space=vmem, size = 0x20000, scoped, tag = 'input window, operand 0']
    #allocation4 [shape = 's32[2]{0}', space=sflag, size = 0x8, scoped, tag = 'scoped memory for tpu_custom_call.1']
    #allocation5 [shape = 's32[2]{0}', space=sflag, size = 0x8, scoped, tag = 'scoped memory for tpu_custom_call.1']
    #allocation6 [shape = 'u8[65536]{0}', space=vmem, size = 0x10000, scoped, tag = 'input window, operand 1, single buffered']
    #allocation7 [shape = 's32[1]{0}', space=sflag, size = 0x4, scoped, tag = 'scoped memory for tpu_custom_call.1']
    #allocation8 [shape = 'u8[65536]{0}', space=vmem, size = 0x10000, scoped, tag = 'output window, operand 0']
    #allocation9 [shape = 'u8[1024]{0}', space=vmem, size = 0x400, scoped, tag = 'output window, operand 1']
    #allocation10 [shape = 's32[2]{0}', space=sflag, size = 0x8, scoped, tag = 'scoped memory for tpu_custom_call.1']
    #allocation11 [shape = 'u8[1024]{0}', space=vmem, size = 0x400, scoped, tag = 'output window, operand 2']
    %11 = vsyncpa [#allocation4], 0
    %s12 = scalar_lea.sflag [#allocation4], 1
    %13 = vsyncpa %s12, 0
    %14 = vsyncpa [#allocation7], 0
    %15 = vsyncpa [#allocation5], 0
    %s16 = scalar_lea.sflag [#allocation5], 1
    %17 = vsyncpa %s16, 0
    %18 = vsyncpa [#allocation10], 0
    %s19 = scalar_lea.sflag [#allocation10], 1
    %20 = vsyncpa %s19, 0
    loop: start=0, step=1, limit=4
    $region2: #{tpu_custom_call.1} parent=1 // loop_pre_header
      _
    $region3: #{tpu_custom_call.1} parent=1 // loop_header
      %s22 = sphi 0, %s26
      %p23 = scmp.ge.s32.totalorder %s22, 4
      %s29 = sphi 0, %s48
      %s30 = sphi 0, %s44
      %s31 = sphi 0, %s40
      %s32 = sphi 0, %s29
      %s33 = sphi 0, %s30
      %s34 = sphi 0, %s31
      %s35 = sphi 0, %s32
      %s36 = sphi 0, %s33
      %s37 = sphi 0, %s34
      %s53 = sphi 0, %s55
      %s56 = sphi 0, %s53
      %s57 = sphi 0, %s56
      %s73 = sphi 0, %s57
      %s81 = sphi 0, %s83
      %s84 = sphi 0, %s81
      %s85 = sphi 0, %s84
      %s101 = sphi 0, %s85
      %s107 = sphi 0, %s109
      %s110 = sphi 0, %s107
      %s111 = sphi 0, %s110
      %s127 = sphi 0, %s111
      %s135 = sphi 0, %s137
      %s138 = sphi 0, %s135
      %s139 = sphi 0, %s138
      %s155 = sphi 0, %s139
      %s163 = sphi 0, %s165
      %s166 = sphi 0, %s163
      %s167 = sphi 0, %s166
      %s183 = sphi 0, %s167
      %s191 = sphi 0, %s193
      %s194 = sphi 0, %s191
      %s195 = sphi 0, %s194
      %s211 = sphi 0, %s195
    $region4: #{tpu_custom_call.1} parent=1 // loop_header_branch
      %25 = sbr.rel (%p23) target = $region8
    $region5: #{tpu_custom_call.1} parent=1 // loop_body
      %s27 = ssub.s32 %s22, 1
      %s28 = ssub.s32 %s22, 2
      %s38 = sadd.s32 1, %s31
      %p39 = scmp.ge.s32.totalorder %s38, 1
      %s40 = scalar_select %p39, 0, %s38
      %s41 = sadd.s32 1, %s30
      %s42 = scalar_select %p39, %s41, %s30
      %p43 = scmp.ge.s32.totalorder %s42, 1
      %s44 = scalar_select %p43, 0, %s42
      %s45 = sadd.s32 1, %s29
      %s46 = scalar_select %p43, %s45, %s29
      %p47 = scmp.ge.s32.totalorder %s46, 2
      %s48 = scalar_select %p47, 0, %s46
      %s49 = ssub.s32 %s29, %s48
      %s50 = ssub.s32 %s31, %s40
      %s51 = sor.u32 %s49, %s50
      %p52 = scmp.eq.s32.totalorder %s51, 0
      %s54 = sadd.s32 %s53, 1
      %s55 = scalar_select %p52, %s53, %s54
      %p58 = pneg %p52
      %p59 = scmp.eq.s32.totalorder %s22, 1
      %p60 = por %p58, %p59
      %p61 = scmp.ne.s32.totalorder %s53, %s56
      %p62 = scmp.eq.s32.totalorder %s22, 0
      %p63 = por %p61, %p62
      %p64 = scmp.ne.s32.totalorder %s53, %s56
      %p65 = scmp.eq.s32.totalorder %s27, 1
      %p66 = por %p64, %p65
      %p67 = scmp.ne.s32.totalorder %s56, %s57
      %p68 = scmp.eq.s32.totalorder %s27, 0
      %p69 = por %p67, %p68
      %p70 = scmp.ne.s32.totalorder %s56, %s57
      %p71 = scmp.eq.s32.totalorder %s28, 1
      %p72 = por %p70, %p71
      %p74 = scmp.ne.s32.totalorder %s57, %s73
      %p75 = scmp.eq.s32.totalorder %s28, 0
      %p76 = por %p74, %p75
      %s77 = ssub.s32 %s31, %s40
      %s78 = ssub.s32 %s30, %s44
      %s79 = sor.u32 %s77, %s78
      %p80 = scmp.eq.s32.totalorder %s79, 0
      %s82 = sadd.s32 %s81, 1
      %s83 = scalar_select %p80, %s81, %s82
      %p86 = pneg %p80
      %p87 = scmp.eq.s32.totalorder %s22, 1
      %p88 = por %p86, %p87
      %p89 = scmp.ne.s32.totalorder %s81, %s84
      %p90 = scmp.eq.s32.totalorder %s22, 0
      %p91 = por %p89, %p90
      %p92 = scmp.ne.s32.totalorder %s81, %s84
      %p93 = scmp.eq.s32.totalorder %s27, 1
      %p94 = por %p92, %p93
      %p95 = scmp.ne.s32.totalorder %s84, %s85
      %p96 = scmp.eq.s32.totalorder %s27, 0
      %p97 = por %p95, %p96
      %p98 = scmp.ne.s32.totalorder %s84, %s85
      %p99 = scmp.eq.s32.totalorder %s28, 1
      %p100 = por %p98, %p99
      %p102 = scmp.ne.s32.totalorder %s85, %s101
      %p103 = scmp.eq.s32.totalorder %s28, 0
      %p104 = por %p102, %p103
      %s105 = ssub.s32 %s30, %s44
      %p106 = scmp.eq.s32.totalorder %s105, 0
      %s108 = sadd.s32 %s107, 1
      %s109 = scalar_select %p106, %s107, %s108
      %p112 = pneg %p106
      %p113 = scmp.eq.s32.totalorder %s22, 1
      %p114 = por %p112, %p113
      %p115 = scmp.ne.s32.totalorder %s107, %s110
      %p116 = scmp.eq.s32.totalorder %s22, 0
      %p117 = por %p115, %p116
      %p118 = scmp.ne.s32.totalorder %s107, %s110
      %p119 = scmp.eq.s32.totalorder %s27, 1
      %p120 = por %p118, %p119
      %p121 = scmp.ne.s32.totalorder %s110, %s111
      %p122 = scmp.eq.s32.totalorder %s27, 0
      %p123 = por %p121, %p122
      %p124 = scmp.ne.s32.totalorder %s110, %s111
      %p125 = scmp.eq.s32.totalorder %s28, 1
      %p126 = por %p124, %p125
      %p128 = scmp.ne.s32.totalorder %s111, %s127
      %p129 = scmp.eq.s32.totalorder %s28, 0
      %p130 = por %p128, %p129
      %s131 = ssub.s32 %s29, %s48
      %s132 = ssub.s32 %s30, %s44
      %s133 = sor.u32 %s131, %s132
      %p134 = scmp.eq.s32.totalorder %s133, 0
      %s136 = sadd.s32 %s135, 1
      %s137 = scalar_select %p134, %s135, %s136
      %p140 = pneg %p134
      %p141 = scmp.eq.s32.totalorder %s22, 1
      %p142 = por %p140, %p141
      %p143 = scmp.ne.s32.totalorder %s135, %s138
      %p144 = scmp.eq.s32.totalorder %s22, 0
      %p145 = por %p143, %p144
      %p146 = scmp.ne.s32.totalorder %s135, %s138
      %p147 = scmp.eq.s32.totalorder %s27, 1
      %p148 = por %p146, %p147
      %p149 = scmp.ne.s32.totalorder %s138, %s139
      %p150 = scmp.eq.s32.totalorder %s27, 0
      %p151 = por %p149, %p150
      %p152 = scmp.ne.s32.totalorder %s138, %s139
      %p153 = scmp.eq.s32.totalorder %s28, 1
      %p154 = por %p152, %p153
      %p156 = scmp.ne.s32.totalorder %s139, %s155
      %p157 = scmp.eq.s32.totalorder %s28, 0
      %p158 = por %p156, %p157
      %s159 = ssub.s32 %s29, %s48
      %s160 = ssub.s32 %s30, %s44
      %s161 = sor.u32 %s159, %s160
      %p162 = scmp.eq.s32.totalorder %s161, 0
      %s164 = sadd.s32 %s163, 1
      %s165 = scalar_select %p162, %s163, %s164
      %p168 = pneg %p162
      %p169 = scmp.eq.s32.totalorder %s22, 1
      %p170 = por %p168, %p169
      %p171 = scmp.ne.s32.totalorder %s163, %s166
      %p172 = scmp.eq.s32.totalorder %s22, 0
      %p173 = por %p171, %p172
      %p174 = scmp.ne.s32.totalorder %s163, %s166
      %p175 = scmp.eq.s32.totalorder %s27, 1
      %p176 = por %p174, %p175
      %p177 = scmp.ne.s32.totalorder %s166, %s167
      %p178 = scmp.eq.s32.totalorder %s27, 0
      %p179 = por %p177, %p178
      %p180 = scmp.ne.s32.totalorder %s166, %s167
      %p181 = scmp.eq.s32.totalorder %s28, 1
      %p182 = por %p180, %p181
      %p184 = scmp.ne.s32.totalorder %s167, %s183
      %p185 = scmp.eq.s32.totalorder %s28, 0
      %p186 = por %p184, %p185
      %s187 = ssub.s32 %s29, %s48
      %s188 = ssub.s32 %s30, %s44
      %s189 = sor.u32 %s187, %s188
      %p190 = scmp.eq.s32.totalorder %s189, 0
      %s192 = sadd.s32 %s191, 1
      %s193 = scalar_select %p190, %s191, %s192
      %p196 = pneg %p190
      %p197 = scmp.eq.s32.totalorder %s22, 1
      %p198 = por %p196, %p197
      %p199 = scmp.ne.s32.totalorder %s191, %s194
      %p200 = scmp.eq.s32.totalorder %s22, 0
      %p201 = por %p199, %p200
      %p202 = scmp.ne.s32.totalorder %s191, %s194
      %p203 = scmp.eq.s32.totalorder %s27, 1
      %p204 = por %p202, %p203
      %p205 = scmp.ne.s32.totalorder %s194, %s195
      %p206 = scmp.eq.s32.totalorder %s27, 0
      %p207 = por %p205, %p206
      %p208 = scmp.ne.s32.totalorder %s194, %s195
      %p209 = scmp.eq.s32.totalorder %s28, 1
      %p210 = por %p208, %p209
      %p212 = scmp.ne.s32.totalorder %s195, %s211
      %p213 = scmp.eq.s32.totalorder %s28, 0
      %p214 = por %p212, %p213
      %p215 = scmp.le.s32.totalorder 1, %s22
      %p216 = scmp.lt.s32.totalorder %s22, 3
      %p217 = pnand %p215, %p216
      %p218 = pneg %p217
      // Predicated region
      $region9: #{tpu_custom_call.1} parent=5 // pred_check
        _
      $region10: #{tpu_custom_call.1} parent=5 // pred_check_branch
        %220 = sbr.rel (%p217) target = $region12
      $region11: #{tpu_custom_call.1} parent=5 // pred_region
        %s221 = ssub.s32 %s22, 1
        // Predicated region
        $region13: #{tpu_custom_call.1} parent=11 // pred_check
          %p222 = pneg %p97
        $region14: #{tpu_custom_call.1} parent=11 // pred_check_branch
          %224 = sbr.rel (%p222) target = $region16
        $region15: #{tpu_custom_call.1} parent=11 // pred_region
          %s225 = smul.u32 32, %s34
          %227 = vsyncadd [#allocation7], 0
          %s228 = sadd.s32 %s33, %s225
          %s229 = smul.addr %s228, 4
          %s230 = scalar_lea.hbm %s1, %s229
          %s231 = sshll.u32 %s230, 4
          %s232 = int_to_ptr.hbm [resolvable:$true] %s231
          %s233 = sshll.u32 [#allocation6], 4
          %s234 = int_to_ptr.vmem [resolvable:$true] %s233
          %239 = dma.hbm_to_vmem [thread:$0]  %s232, 2048, %s234, [#allocation7], 64, 64, 4
        $region16: #{tpu_custom_call.1} parent=11 // pred_fallthru
          _
        // Predicated region
        $region17: #{tpu_custom_call.1} parent=11 // pred_check
          %p240 = pneg %p123
        $region18: #{tpu_custom_call.1} parent=11 // pred_check_branch
          %242 = sbr.rel (%p240) target = $region20
        $region19: #{tpu_custom_call.1} parent=11 // pred_region
          %p243 = scmp.lt.s32.totalorder %s33, 0
          %s244 = scalar_select %p243, %s33, 0
          %s245 = scalar_lea.vmem %s2, %s244
        $region20: #{tpu_custom_call.1} parent=11 // pred_fallthru
          _
      $region12: #{tpu_custom_call.1} parent=5 // pred_fallthru
        _
      %p246 = scmp.lt.s32.totalorder %s22, 2
      // Predicated region
      $region21: #{tpu_custom_call.1} parent=5 // pred_check
        %p247 = pneg %p246
      $region22: #{tpu_custom_call.1} parent=5 // pred_check_branch
        %249 = sbr.rel (%p247) target = $region24
      $region23: #{tpu_custom_call.1} parent=5 // pred_region
        // Predicated region
        $region25: #{tpu_custom_call.1} parent=23 // pred_check
          %p250 = pneg %p63
        $region26: #{tpu_custom_call.1} parent=23 // pred_check_branch
          %252 = sbr.rel (%p250) target = $region28
        $region27: #{tpu_custom_call.1} parent=23 // pred_region
          %s253 = sand.u32 %s53, 1
          %s254 = scalar_lea.sflag [#allocation4], %s253
          %s255 = sand.u32 %s53, 1
          %s256 = smul.addr %s255, 128
          %s257 = scalar_lea.vmem [#allocation3], %s256
          %s258 = smul.u32 16, %s29
          %s259 = smul.u32 2, %s31
          %261 = vsyncadd %s254, 0
          %s262 = smul.addr %s258, 2
          %s263 = sadd.s32 %s259, %s262
          %s264 = smul.addr %s263, 4
          %s265 = scalar_lea.hbm %s0, %s264
          %s266 = sshll.u32 %s265, 4
          %s267 = int_to_ptr.hbm [resolvable:$true] %s266
          %s268 = sshll.u32 %s257, 4
          %s269 = int_to_ptr.vmem [resolvable:$true] %s268
          %274 = dma.hbm_to_vmem [thread:$0]  %s267, 2048, %s269, %s254, 128, 128, 8
        $region28: #{tpu_custom_call.1} parent=23 // pred_fallthru
          _
      $region24: #{tpu_custom_call.1} parent=5 // pred_fallthru
        _
      %p275 = scmp.le.s32.totalorder 1, %s22
      %p276 = scmp.lt.s32.totalorder %s22, 3
      %p277 = pnand %p275, %p276
      %p278 = pneg %p277
      // Predicated region
      $region29: #{tpu_custom_call.1} parent=5 // pred_check
        _
      $region30: #{tpu_custom_call.1} parent=5 // pred_check_branch
        %280 = sbr.rel (%p277) target = $region32
      $region31: #{tpu_custom_call.1} parent=5 // pred_region
        %s281 = ssub.s32 %s22, 1
        %s282 = sand.u32 %s56, 1
        %s283 = scalar_lea.sflag [#allocation4], %s282
        %s284 = sand.u32 %s56, 1
        %s285 = smul.addr %s284, 128
        %s286 = scalar_lea.vmem [#allocation3], %s285
        // Predicated region
        $region33: #{tpu_custom_call.1} parent=31 // pred_check
          %p287 = pneg %p69
        $region34: #{tpu_custom_call.1} parent=31 // pred_check_branch
          %289 = sbr.rel (%p287) target = $region36
        $region35: #{tpu_custom_call.1} parent=31 // pred_region
          %291 = dma.done %s283, 2048
        $region36: #{tpu_custom_call.1} parent=31 // pred_fallthru
          _
        // Predicated region
        $region37: #{tpu_custom_call.1} parent=31 // pred_check
          %p292 = pneg %p97
        $region38: #{tpu_custom_call.1} parent=31 // pred_check_branch
          %294 = sbr.rel (%p292) target = $region40
        $region39: #{tpu_custom_call.1} parent=31 // pred_region
          %296 = dma.done [#allocation7], 2048
        $region40: #{tpu_custom_call.1} parent=31 // pred_fallthru
          _
        %s297 = sand.u32 %s56, 1
        %s298 = scalar_lea.sflag [#allocation4], %s297
        %s299 = sand.u32 %s56, 1
        %s300 = smul.addr %s299, 128
        %s301 = scalar_lea.vmem [#allocation3], %s300
        %p302 = pneg %p69
        %p303 = pneg %p66
        %p304 = pneg %p97
        %p305 = pneg %p94
        %p306 = scmp.lt.s32.totalorder %s33, 0
        %s307 = scalar_select %p306, %s33, 0
        %s308 = scalar_lea.vmem %s2, %s307
        %p309 = pneg %p123
        %p310 = pneg %p120
        %p311 = pneg %p151
        %p312 = pneg %p148
        %s313 = sand.u32 %s138, 1
        %s314 = scalar_lea.sflag [#allocation5], %s313
        %s315 = sand.u32 %s138, 1
        %s316 = smul.addr %s315, 64
        %s317 = scalar_lea.vmem [#allocation8], %s316
        %p318 = pneg %p179
        %p319 = pneg %p176
        %s320 = sand.u32 %s27, 1
        %s321 = scalar_lea.sflag [#allocation10], %s320
        %s322 = sand.u32 %s166, 1
        %s323 = scalar_lea.vmem [#allocation9], %s322
        %p324 = pneg %p207
        %p325 = pneg %p204
        %s326 = sand.u32 %s27, 1
        %s327 = scalar_lea.sflag [#allocation10], %s326
        %s328 = sand.u32 %s194, 1
        %s329 = scalar_lea.vmem [#allocation11], %s328
        %s330 = smul.u32 16, %s32
        %s331 = smul.u32 2, %s34
        %s332 = smul.u32 32, %s34
        %p333 = scmp.lt.s32.totalorder %s33, 0
        %s334 = scalar_select %p333, %s33, 0
        %s335 = scalar_lea.vmem %s2, %s334
        %s336 = smul.u32 16, %s32
        %p337 = scmp.eq.s32.totalorder %s34, 0
        // Predicated region
        $region41: #{tpu_custom_call.1} parent=31 // pred_check
          %p338 = pneg %p337
        $region42: #{tpu_custom_call.1} parent=31 // pred_check_branch
          %340 = sbr.rel (%p338) target = $region44
        $region43: #{tpu_custom_call.1} parent=31 // pred_region
          %341 = vst [vmem:[#allocation2] sm:$0xff] 0.0
          %342 = vst [vmem:[#allocation2 + $0x8] sm:$0xff] 0.0
          %343 = vst [vmem:[#allocation2 + $0x10] sm:$0xff] 0.0
          %344 = vst [vmem:[#allocation2 + $0x18] sm:$0xff] 0.0
          %345 = vst [vmem:[#allocation2 + $0x20] sm:$0xff] 0.0
          %346 = vst [vmem:[#allocation2 + $0x28] sm:$0xff] 0.0
          %347 = vst [vmem:[#allocation2 + $0x30] sm:$0xff] 0.0
          %348 = vst [vmem:[#allocation2 + $0x38] sm:$0xff] 0.0
          %349 = vst [vmem:[#allocation2 + $0x40] sm:$0xff] 0.0
          %350 = vst [vmem:[#allocation2 + $0x48] sm:$0xff] 0.0
          %351 = vst [vmem:[#allocation2 + $0x50] sm:$0xff] 0.0
          %352 = vst [vmem:[#allocation2 + $0x58] sm:$0xff] 0.0
          %353 = vst [vmem:[#allocation2 + $0x60] sm:$0xff] 0.0
          %354 = vst [vmem:[#allocation2 + $0x68] sm:$0xff] 0.0
          %355 = vst [vmem:[#allocation2 + $0x70] sm:$0xff] 0.0
          %356 = vst [vmem:[#allocation2 + $0x78] sm:$0xff] 0.0
        $region44: #{tpu_custom_call.1} parent=31 // pred_fallthru
          _
        %v357 = vld [vmem:[#allocation2] sm:$0xff]
        %v358 = vld [vmem:[#allocation2 + $0x8] sm:$0xff]
        %v359 = vld [vmem:[#allocation2 + $0x10] sm:$0xff]
        %v360 = vld [vmem:[#allocation2 + $0x18] sm:$0xff]
        %v361 = vld [vmem:[#allocation2 + $0x20] sm:$0xff]
        %v362 = vld [vmem:[#allocation2 + $0x28] sm:$0xff]
        %v363 = vld [vmem:[#allocation2 + $0x30] sm:$0xff]
        %v364 = vld [vmem:[#allocation2 + $0x38] sm:$0xff]
        %v365 = vld [vmem:[#allocation2 + $0x40] sm:$0xff]
        %v366 = vld [vmem:[#allocation2 + $0x48] sm:$0xff]
        %v367 = vld [vmem:[#allocation2 + $0x50] sm:$0xff]
        %v368 = vld [vmem:[#allocation2 + $0x58] sm:$0xff]
        %v369 = vld [vmem:[#allocation2 + $0x60] sm:$0xff]
        %v370 = vld [vmem:[#allocation2 + $0x68] sm:$0xff]
        %v371 = vld [vmem:[#allocation2 + $0x70] sm:$0xff]
        %v372 = vld [vmem:[#allocation2 + $0x78] sm:$0xff]
        %v373 = vld [vmem:[%s286] sm:$0xff]
        %v374 = vld [vmem:[%s286 + $0x8] sm:$0xff]
        %v375 = vld [vmem:[%s286 + $0x10] sm:$0xff]
        %v376 = vld [vmem:[%s286 + $0x18] sm:$0xff]
        %v377 = vld [vmem:[%s286 + $0x20] sm:$0xff]
        %v378 = vld [vmem:[%s286 + $0x28] sm:$0xff]
        %v379 = vld [vmem:[%s286 + $0x30] sm:$0xff]
        %v380 = vld [vmem:[%s286 + $0x38] sm:$0xff]
        %v381 = vld [vmem:[%s286 + $0x40] sm:$0xff]
        %v382 = vld [vmem:[%s286 + $0x48] sm:$0xff]
        %v383 = vld [vmem:[%s286 + $0x50] sm:$0xff]
        %v384 = vld [vmem:[%s286 + $0x58] sm:$0xff]
        %v385 = vld [vmem:[%s286 + $0x60] sm:$0xff]
        %v386 = vld [vmem:[%s286 + $0x68] sm:$0xff]
        %v387 = vld [vmem:[%s286 + $0x70] sm:$0xff]
        %v388 = vld [vmem:[%s286 + $0x78] sm:$0xff]
        %v389 = vld [vmem:[#allocation6] sm:$0xf]
        %v390 = vld [vmem:[#allocation6 + $0x4] sm:$0xf]
        %v391 = vld [vmem:[#allocation6 + $0x8] sm:$0xf]
        %v392 = vld [vmem:[#allocation6 + $0xc] sm:$0xf]
        %v393 = vld [vmem:[#allocation6 + $0x10] sm:$0xf]
        %v394 = vld [vmem:[#allocation6 + $0x14] sm:$0xf]
        %v395 = vld [vmem:[#allocation6 + $0x18] sm:$0xf]
        %v396 = vld [vmem:[#allocation6 + $0x1c] sm:$0xf]
        %v397 = vld [vmem:[#allocation6 + $0x20] sm:$0xf]
        %v398 = vld [vmem:[#allocation6 + $0x24] sm:$0xf]
        %v399 = vld [vmem:[#allocation6 + $0x28] sm:$0xf]
        %v400 = vld [vmem:[#allocation6 + $0x2c] sm:$0xf]
        %v401 = vld [vmem:[#allocation6 + $0x30] sm:$0xf]
        %v402 = vld [vmem:[#allocation6 + $0x34] sm:$0xf]
        %v403 = vld [vmem:[#allocation6 + $0x38] sm:$0xf]
        %v404 = vld [vmem:[#allocation6 + $0x3c] sm:$0xf]
        %v405 = vld [vmem:[#allocation6 + $0x40] sm:$0xf]
        %v406 = vld [vmem:[#allocation6 + $0x44] sm:$0xf]
        %v407 = vld [vmem:[#allocation6 + $0x48] sm:$0xf]
        %v408 = vld [vmem:[#allocation6 + $0x4c] sm:$0xf]
        %v409 = vld [vmem:[#allocation6 + $0x50] sm:$0xf]
        %v410 = vld [vmem:[#allocation6 + $0x54] sm:$0xf]
        %v411 = vld [vmem:[#allocation6 + $0x58] sm:$0xf]
        %v412 = vld [vmem:[#allocation6 + $0x5c] sm:$0xf]
        %v413 = vld [vmem:[#allocation6 + $0x60] sm:$0xf]
        %v414 = vld [vmem:[#allocation6 + $0x64] sm:$0xf]
        %v415 = vld [vmem:[#allocation6 + $0x68] sm:$0xf]
        %v416 = vld [vmem:[#allocation6 + $0x6c] sm:$0xf]
        %v417 = vld [vmem:[#allocation6 + $0x70] sm:$0xf]
        %v418 = vld [vmem:[#allocation6 + $0x74] sm:$0xf]
        %v419 = vld [vmem:[#allocation6 + $0x78] sm:$0xf]
        %v420 = vld [vmem:[#allocation6 + $0x7c] sm:$0xf]
        %v437 = vunpack.c.l.b16 %v373
        %v438 = vunpack.c.h.b16 %v373
        %v439 = vunpack.c.l.b16 %v374
        %v440 = vunpack.c.h.b16 %v374
        %v441 = vunpack.c.l.b16 %v375
        %v442 = vunpack.c.h.b16 %v375
        %v443 = vunpack.c.l.b16 %v376
        %v444 = vunpack.c.h.b16 %v376
        %v445 = vunpack.c.l.b16 %v377
        %v446 = vunpack.c.h.b16 %v377
        %v447 = vunpack.c.l.b16 %v378
        %v448 = vunpack.c.h.b16 %v378
        %v449 = vunpack.c.l.b16 %v379
        %v450 = vunpack.c.h.b16 %v379
        %v451 = vunpack.c.l.b16 %v380
        %v452 = vunpack.c.h.b16 %v380
        %v453 = vunpack.c.l.b16 %v381
        %v454 = vunpack.c.h.b16 %v381
        %v455 = vunpack.c.l.b16 %v382
        %v456 = vunpack.c.h.b16 %v382
        %v457 = vunpack.c.l.b16 %v383
        %v458 = vunpack.c.h.b16 %v383
        %v459 = vunpack.c.l.b16 %v384
        %v460 = vunpack.c.h.b16 %v384
        %v461 = vunpack.c.l.b16 %v385
        %v462 = vunpack.c.h.b16 %v385
        %v463 = vunpack.c.l.b16 %v386
        %v464 = vunpack.c.h.b16 %v386
        %v465 = vunpack.c.l.b16 %v387
        %v466 = vunpack.c.h.b16 %v387
        %v467 = vunpack.c.l.b16 %v388
        %v468 = vunpack.c.h.b16 %v388
        %v469 = vpack.c.b16 %v439, %v437
        %v470 = vpack.c.b16 %v440, %v438
        %v471 = vpack.c.b16 %v443, %v441
        %v472 = vpack.c.b16 %v444, %v442
        %v473 = vpack.c.b16 %v447, %v445
        %v474 = vpack.c.b16 %v448, %v446
        %v475 = vpack.c.b16 %v451, %v449
        %v476 = vpack.c.b16 %v452, %v450
        %v477 = vpack.c.b16 %v455, %v453
        %v478 = vpack.c.b16 %v456, %v454
        %v479 = vpack.c.b16 %v459, %v457
        %v480 = vpack.c.b16 %v460, %v458
        %v481 = vpack.c.b16 %v463, %v461
        %v482 = vpack.c.b16 %v464, %v462
        %v483 = vpack.c.b16 %v467, %v465
        %v484 = vpack.c.b16 %v468, %v466
        %v533 = vunpack.c.l.b16 %v389
        %v534 = vunpack.c.l.b16 %v390
        %v535 = vunpack.c.l.b16 %v391
        %v536 = vunpack.c.l.b16 %v392
        %v537 = vunpack.c.l.b16 %v393
        %v538 = vunpack.c.l.b16 %v394
        %v539 = vunpack.c.l.b16 %v395
        %v540 = vunpack.c.l.b16 %v396
        %v541 = vunpack.c.l.b16 %v397
        %v542 = vunpack.c.l.b16 %v398
        %v543 = vunpack.c.l.b16 %v399
        %v544 = vunpack.c.l.b16 %v400
        %v545 = vunpack.c.l.b16 %v401
        %v546 = vunpack.c.l.b16 %v402
        %v547 = vunpack.c.l.b16 %v403
        %v548 = vunpack.c.l.b16 %v404
        %v549 = vunpack.c.l.b16 %v405
        %v550 = vunpack.c.l.b16 %v406
        %v551 = vunpack.c.l.b16 %v407
        %v552 = vunpack.c.l.b16 %v408
        %v553 = vunpack.c.l.b16 %v409
        %v554 = vunpack.c.l.b16 %v410
        %v555 = vunpack.c.l.b16 %v411
        %v556 = vunpack.c.l.b16 %v412
        %v557 = vunpack.c.l.b16 %v413
        %v558 = vunpack.c.l.b16 %v414
        %v559 = vunpack.c.l.b16 %v415
        %v560 = vunpack.c.l.b16 %v416
        %v561 = vunpack.c.l.b16 %v417
        %v562 = vunpack.c.l.b16 %v418
        %v563 = vunpack.c.l.b16 %v419
        %v564 = vunpack.c.l.b16 %v420
        %v565 = vpack.c.b16 %v534, %v533
        %v566 = vpack.c.b16 %v536, %v535
        %v567 = vpack.c.b16 %v538, %v537
        %v568 = vpack.c.b16 %v540, %v539
        %v569 = vpack.c.b16 %v542, %v541
        %v570 = vpack.c.b16 %v544, %v543
        %v571 = vpack.c.b16 %v546, %v545
        %v572 = vpack.c.b16 %v548, %v547
        %v573 = vpack.c.b16 %v550, %v549
        %v574 = vpack.c.b16 %v552, %v551
        %v575 = vpack.c.b16 %v554, %v553
        %v576 = vpack.c.b16 %v556, %v555
        %v577 = vpack.c.b16 %v558, %v557
        %v578 = vpack.c.b16 %v560, %v559
        %v579 = vpack.c.b16 %v562, %v561
        %v580 = vpack.c.b16 %v564, %v563
        %597 = vmatpush.bf16.msra.mxu0 %v572
        %598 = vmatpush.bf16.msra.mxu0 %v571
        %599 = vmatpush.bf16.msra.mxu0 %v570
        %600 = vmatpush.bf16.msra.mxu0 %v569
        %601 = vmatpush.bf16.msra.mxu0 %v568
        %602 = vmatpush.bf16.msra.mxu0 %v567
        %603 = vmatpush.bf16.msra.mxu0 %v566
        %604 = vmatpush.bf16.msra.mxu0 %v565
        %605 = vmatmul.bf16.gmra.mxu0 %v469
        %v606 = vpop.f32.mrf.mxu0
        %v607 = vadd.f32 0.0, %v606
        %v608 = vpop.f32.mrf.mxu0
        %v609 = vadd.f32 0.0, %v608
        %610 = vmatmul.bf16.gmra.mxu0 %v471
        %v611 = vpop.f32.mrf.mxu0
        %v612 = vadd.f32 0.0, %v611
        %v613 = vpop.f32.mrf.mxu0
        %v614 = vadd.f32 0.0, %v613
        %615 = vmatmul.bf16.gmra.mxu0 %v473
        %v616 = vpop.f32.mrf.mxu0
        %v617 = vadd.f32 0.0, %v616
        %v618 = vpop.f32.mrf.mxu0
        %v619 = vadd.f32 0.0, %v618
        %620 = vmatmul.bf16.gmra.mxu0 %v475
        %v621 = vpop.f32.mrf.mxu0
        %v622 = vadd.f32 0.0, %v621
        %v623 = vpop.f32.mrf.mxu0
        %v624 = vadd.f32 0.0, %v623
        %625 = vmatmul.bf16.gmra.mxu0 %v477
        %v626 = vpop.f32.mrf.mxu0
        %v627 = vadd.f32 0.0, %v626
        %v628 = vpop.f32.mrf.mxu0
        %v629 = vadd.f32 0.0, %v628
        %630 = vmatmul.bf16.gmra.mxu0 %v479
        %v631 = vpop.f32.mrf.mxu0
        %v632 = vadd.f32 0.0, %v631
        %v633 = vpop.f32.mrf.mxu0
        %v634 = vadd.f32 0.0, %v633
        %635 = vmatmul.bf16.gmra.mxu0 %v481
        %v636 = vpop.f32.mrf.mxu0
        %v637 = vadd.f32 0.0, %v636
        %v638 = vpop.f32.mrf.mxu0
        %v639 = vadd.f32 0.0, %v638
        %640 = vmatmul.bf16.gmra.mxu0 %v483
        %v641 = vpop.f32.mrf.mxu0
        %v642 = vadd.f32 0.0, %v641
        %v643 = vpop.f32.mrf.mxu0
        %v644 = vadd.f32 0.0, %v643
        %645 = vdwg.mxu0
        %646 = vmatpush.bf16.msra.mxu0 %v580
        %647 = vmatpush.bf16.msra.mxu0 %v579
        %648 = vmatpush.bf16.msra.mxu0 %v578
        %649 = vmatpush.bf16.msra.mxu0 %v577
        %650 = vmatpush.bf16.msra.mxu0 %v576
        %651 = vmatpush.bf16.msra.mxu0 %v575
        %652 = vmatpush.bf16.msra.mxu0 %v574
        %653 = vmatpush.bf16.msra.mxu0 %v573
        %654 = vmatmul.bf16.gmra.mxu0 %v470
        %v655 = vpop.f32.mrf.mxu0
        %v656 = vadd.f32 %v607, %v655
        %v657 = vpop.f32.mrf.mxu0
        %v658 = vadd.f32 %v609, %v657
        %659 = vmatmul.bf16.gmra.mxu0 %v472
        %v660 = vpop.f32.mrf.mxu0
        %v661 = vadd.f32 %v612, %v660
        %v662 = vpop.f32.mrf.mxu0
        %v663 = vadd.f32 %v614, %v662
        %664 = vmatmul.bf16.gmra.mxu0 %v474
        %v665 = vpop.f32.mrf.mxu0
        %v666 = vadd.f32 %v617, %v665
        %v667 = vpop.f32.mrf.mxu0
        %v668 = vadd.f32 %v619, %v667
        %669 = vmatmul.bf16.gmra.mxu0 %v476
        %v670 = vpop.f32.mrf.mxu0
        %v671 = vadd.f32 %v622, %v670
        %v672 = vpop.f32.mrf.mxu0
        %v673 = vadd.f32 %v624, %v672
        %674 = vmatmul.bf16.gmra.mxu0 %v478
        %v675 = vpop.f32.mrf.mxu0
        %v676 = vadd.f32 %v627, %v675
        %v677 = vpop.f32.mrf.mxu0
        %v678 = vadd.f32 %v629, %v677
        %679 = vmatmul.bf16.gmra.mxu0 %v480
        %v680 = vpop.f32.mrf.mxu0
        %v681 = vadd.f32 %v632, %v680
        %v682 = vpop.f32.mrf.mxu0
        %v683 = vadd.f32 %v634, %v682
        %684 = vmatmul.bf16.gmra.mxu0 %v482
        %v685 = vpop.f32.mrf.mxu0
        %v686 = vadd.f32 %v637, %v685
        %v687 = vpop.f32.mrf.mxu0
        %v688 = vadd.f32 %v639, %v687
        %689 = vmatmul.bf16.gmra.mxu0 %v484
        %v690 = vpop.f32.mrf.mxu0
        %v691 = vadd.f32 %v642, %v690
        %v692 = vpop.f32.mrf.mxu0
        %v693 = vadd.f32 %v644, %v692
        %694 = vdwg.mxu0
        %v695 = vadd.f32 %v357, %v656
        %v696 = vadd.f32 %v358, %v658
        %v697 = vadd.f32 %v359, %v661
        %v698 = vadd.f32 %v360, %v663
        %v699 = vadd.f32 %v361, %v666
        %v700 = vadd.f32 %v362, %v668
        %v701 = vadd.f32 %v363, %v671
        %v702 = vadd.f32 %v364, %v673
        %v703 = vadd.f32 %v365, %v676
        %v704 = vadd.f32 %v366, %v678
        %v705 = vadd.f32 %v367, %v681
        %v706 = vadd.f32 %v368, %v683
        %v707 = vadd.f32 %v369, %v686
        %v708 = vadd.f32 %v370, %v688
        %v709 = vadd.f32 %v371, %v691
        %v710 = vadd.f32 %v372, %v693
        %711 = vst [vmem:[#allocation2] sm:$0xff] %v695
        %712 = vst [vmem:[#allocation2 + $0x8] sm:$0xff] %v696
        %713 = vst [vmem:[#allocation2 + $0x10] sm:$0xff] %v697
        %714 = vst [vmem:[#allocation2 + $0x18] sm:$0xff] %v698
        %715 = vst [vmem:[#allocation2 + $0x20] sm:$0xff] %v699
        %716 = vst [vmem:[#allocation2 + $0x28] sm:$0xff] %v700
        %717 = vst [vmem:[#allocation2 + $0x30] sm:$0xff] %v701
        %718 = vst [vmem:[#allocation2 + $0x38] sm:$0xff] %v702
        %719 = vst [vmem:[#allocation2 + $0x40] sm:$0xff] %v703
        %720 = vst [vmem:[#allocation2 + $0x48] sm:$0xff] %v704
        %721 = vst [vmem:[#allocation2 + $0x50] sm:$0xff] %v705
        %722 = vst [vmem:[#allocation2 + $0x58] sm:$0xff] %v706
        %723 = vst [vmem:[#allocation2 + $0x60] sm:$0xff] %v707
        %724 = vst [vmem:[#allocation2 + $0x68] sm:$0xff] %v708
        %725 = vst [vmem:[#allocation2 + $0x70] sm:$0xff] %v709
        %726 = vst [vmem:[#allocation2 + $0x78] sm:$0xff] %v710
        // Predicated region
        $region45: #{tpu_custom_call.1} parent=31 // pred_check
          %p727 = pneg %p337
        $region46: #{tpu_custom_call.1} parent=31 // pred_check_branch
          %729 = sbr.rel (%p727) target = $region48
        $region47: #{tpu_custom_call.1} parent=31 // pred_region
          %v730 = vld [vmem:[#allocation2] sm:$0xff]
          %v731 = vld [vmem:[#allocation2 + $0x8] sm:$0xff]
          %v732 = vld [vmem:[#allocation2 + $0x10] sm:$0xff]
          %v733 = vld [vmem:[#allocation2 + $0x18] sm:$0xff]
          %v734 = vld [vmem:[#allocation2 + $0x20] sm:$0xff]
          %v735 = vld [vmem:[#allocation2 + $0x28] sm:$0xff]
          %v736 = vld [vmem:[#allocation2 + $0x30] sm:$0xff]
          %v737 = vld [vmem:[#allocation2 + $0x38] sm:$0xff]
          %v738 = vld [vmem:[#allocation2 + $0x40] sm:$0xff]
          %v739 = vld [vmem:[#allocation2 + $0x48] sm:$0xff]
          %v740 = vld [vmem:[#allocation2 + $0x50] sm:$0xff]
          %v741 = vld [vmem:[#allocation2 + $0x58] sm:$0xff]
          %v742 = vld [vmem:[#allocation2 + $0x60] sm:$0xff]
          %v743 = vld [vmem:[#allocation2 + $0x68] sm:$0xff]
          %v744 = vld [vmem:[#allocation2 + $0x70] sm:$0xff]
          %v745 = vld [vmem:[#allocation2 + $0x78] sm:$0xff]
          %v746 = vld [vmem:[%s335] sm:$0x1]
          %v748 = vperm.slane %v746, 0
          %v750 = vadd.f32 %v730, %v748
          %v751 = vadd.f32 %v731, %v748
          %v752 = vadd.f32 %v732, %v748
          %v753 = vadd.f32 %v733, %v748
          %v754 = vadd.f32 %v734, %v748
          %v755 = vadd.f32 %v735, %v748
          %v756 = vadd.f32 %v736, %v748
          %v757 = vadd.f32 %v737, %v748
          %v758 = vadd.f32 %v738, %v748
          %v759 = vadd.f32 %v739, %v748
          %v760 = vadd.f32 %v740, %v748
          %v761 = vadd.f32 %v741, %v748
          %v762 = vadd.f32 %v742, %v748
          %v763 = vadd.f32 %v743, %v748
          %v764 = vadd.f32 %v744, %v748
          %v765 = vadd.f32 %v745, %v748
          %v766 = vpack.c.bf16 %v750, %v750
          %v767 = vpack.c.bf16 %v751, %v751
          %v768 = vpack.c.bf16 %v752, %v752
          %v769 = vpack.c.bf16 %v753, %v753
          %v770 = vpack.c.bf16 %v754, %v754
          %v771 = vpack.c.bf16 %v755, %v755
          %v772 = vpack.c.bf16 %v756, %v756
          %v773 = vpack.c.bf16 %v757, %v757
          %v774 = vpack.c.bf16 %v758, %v758
          %v775 = vpack.c.bf16 %v759, %v759
          %v776 = vpack.c.bf16 %v760, %v760
          %v777 = vpack.c.bf16 %v761, %v761
          %v778 = vpack.c.bf16 %v762, %v762
          %v779 = vpack.c.bf16 %v763, %v763
          %v780 = vpack.c.bf16 %v764, %v764
          %v781 = vpack.c.bf16 %v765, %v765
          %782 = vst [vmem:[%s317] sm:$0xf] %v766
          %783 = vst [vmem:[%s317 + $0x4] sm:$0xf] %v767
          %784 = vst [vmem:[%s317 + $0x8] sm:$0xf] %v768
          %785 = vst [vmem:[%s317 + $0xc] sm:$0xf] %v769
          %786 = vst [vmem:[%s317 + $0x10] sm:$0xf] %v770
          %787 = vst [vmem:[%s317 + $0x14] sm:$0xf] %v771
          %788 = vst [vmem:[%s317 + $0x18] sm:$0xf] %v772
          %789 = vst [vmem:[%s317 + $0x1c] sm:$0xf] %v773
          %790 = vst [vmem:[%s317 + $0x20] sm:$0xf] %v774
          %791 = vst [vmem:[%s317 + $0x24] sm:$0xf] %v775
          %792 = vst [vmem:[%s317 + $0x28] sm:$0xf] %v776
          %793 = vst [vmem:[%s317 + $0x2c] sm:$0xf] %v777
          %794 = vst [vmem:[%s317 + $0x30] sm:$0xf] %v778
          %795 = vst [vmem:[%s317 + $0x34] sm:$0xf] %v779
          %796 = vst [vmem:[%s317 + $0x38] sm:$0xf] %v780
          %797 = vst [vmem:[%s317 + $0x3c] sm:$0xf] %v781
          %v798 = vadd.f32 %v750, %v751
          %v799 = vadd.f32 %v798, %v752
          %v800 = vadd.f32 %v799, %v753
          %v801 = vadd.f32 %v800, %v754
          %v802 = vadd.f32 %v801, %v755
          %v803 = vadd.f32 %v802, %v756
          %v804 = vadd.f32 %v803, %v757
          %v805 = vadd.f32 %v804, %v758
          %v806 = vadd.f32 %v805, %v759
          %v807 = vadd.f32 %v806, %v760
          %v808 = vadd.f32 %v807, %v761
          %v809 = vadd.f32 %v808, %v762
          %v810 = vadd.f32 %v809, %v763
          %v811 = vadd.f32 %v810, %v764
          %v812 = vadd.f32 %v811, %v765
          %v813 = vrot.slane %v812, 4
          %v814 = vadd.f32 %v812, %v813
          %v815 = vrot.slane %v814, 2
          %v816 = vadd.f32 %v814, %v815
          %v817 = vrot.slane %v816, 1
          %v818 = vadd.f32 %v816, %v817
          %819 = vst [vmem:[%s323] sm:$0x1] %v818
          %v820 = vmul.f32 %v750, %v750
          %v821 = vmul.f32 %v751, %v751
          %v822 = vmul.f32 %v752, %v752
          %v823 = vmul.f32 %v753, %v753
          %v824 = vmul.f32 %v754, %v754
          %v825 = vmul.f32 %v755, %v755
          %v826 = vmul.f32 %v756, %v756
          %v827 = vmul.f32 %v757, %v757
          %v828 = vmul.f32 %v758, %v758
          %v829 = vmul.f32 %v759, %v759
          %v830 = vmul.f32 %v760, %v760
          %v831 = vmul.f32 %v761, %v761
          %v832 = vmul.f32 %v762, %v762
          %v833 = vmul.f32 %v763, %v763
          %v834 = vmul.f32 %v764, %v764
          %v835 = vmul.f32 %v765, %v765
          %v836 = vadd.f32 %v820, %v821
          %v837 = vadd.f32 %v836, %v822
          %v838 = vadd.f32 %v837, %v823
          %v839 = vadd.f32 %v838, %v824
          %v840 = vadd.f32 %v839, %v825
          %v841 = vadd.f32 %v840, %v826
          %v842 = vadd.f32 %v841, %v827
          %v843 = vadd.f32 %v842, %v828
          %v844 = vadd.f32 %v843, %v829
          %v845 = vadd.f32 %v844, %v830
          %v846 = vadd.f32 %v845, %v831
          %v847 = vadd.f32 %v846, %v832
          %v848 = vadd.f32 %v847, %v833
          %v849 = vadd.f32 %v848, %v834
          %v850 = vadd.f32 %v849, %v835
          %v851 = vrot.slane %v850, 4
          %v852 = vadd.f32 %v850, %v851
          %v853 = vrot.slane %v852, 2
          %v854 = vadd.f32 %v852, %v853
          %v855 = vrot.slane %v854, 1
          %v856 = vadd.f32 %v854, %v855
          %857 = vst [vmem:[%s329] sm:$0x1] %v856
        $region48: #{tpu_custom_call.1} parent=31 // pred_fallthru
          _
        %s858 = sand.u32 %s138, 1
        %s859 = scalar_lea.sflag [#allocation5], %s858
        %s860 = sand.u32 %s138, 1
        %s861 = smul.addr %s860, 64
        %s862 = scalar_lea.vmem [#allocation8], %s861
        %s863 = sand.u32 %s27, 1
        %s864 = scalar_lea.sflag [#allocation10], %s863
        %s865 = sand.u32 %s166, 1
        %s866 = scalar_lea.vmem [#allocation9], %s865
        %s867 = sand.u32 %s27, 1
        %s868 = scalar_lea.sflag [#allocation10], %s867
        %s869 = sand.u32 %s194, 1
        %s870 = scalar_lea.vmem [#allocation11], %s869
        // Predicated region
        $region49: #{tpu_custom_call.1} parent=31 // pred_check
          %p871 = pneg %p148
        $region50: #{tpu_custom_call.1} parent=31 // pred_check_branch
          %873 = sbr.rel (%p871) target = $region52
        $region51: #{tpu_custom_call.1} parent=31 // pred_region
          %s874 = smul.u32 16, %s32
          %876 = vsyncadd %s859, 0
          %s877 = sadd.s32 %s33, %s874
          %s878 = smul.addr %s877, 4
          %s879 = scalar_lea.hbm %s3, %s878
          %s880 = sshll.u32 %s862, 4
          %s881 = int_to_ptr.vmem [resolvable:$true] %s880
          %s882 = sshll.u32 %s879, 4
          %s883 = int_to_ptr.hbm [resolvable:$true] %s882
          %888 = dma.vmem_to_hbm [thread:$0]  %s881, 1024, %s883, %s859, 64, 64, 4
        $region52: #{tpu_custom_call.1} parent=31 // pred_fallthru
          _
        // Predicated region
        $region53: #{tpu_custom_call.1} parent=31 // pred_check
          %p889 = pneg %p176
        $region54: #{tpu_custom_call.1} parent=31 // pred_check_branch
          %891 = sbr.rel (%p889) target = $region56
        $region55: #{tpu_custom_call.1} parent=31 // pred_region
          %893 = vsyncadd %s864, 0
          %s894 = sadd.s32 %s33, %s32
          %s895 = scalar_lea.hbm %s4, %s894
          %s897 = sshll.u32 %s866, 4
          %s898 = int_to_ptr.vmem [resolvable:$true] %s897
          %s899 = sshll.u32 %s895, 4
          %s900 = int_to_ptr.hbm [resolvable:$true] %s899
          %902 = dma.vmem_to_hbm [thread:$0]  %s898, 16, %s900, %s864
        $region56: #{tpu_custom_call.1} parent=31 // pred_fallthru
          _
        // Predicated region
        $region57: #{tpu_custom_call.1} parent=31 // pred_check
          %p903 = pneg %p204
        $region58: #{tpu_custom_call.1} parent=31 // pred_check_branch
          %905 = sbr.rel (%p903) target = $region60
        $region59: #{tpu_custom_call.1} parent=31 // pred_region
          %907 = vsyncadd %s868, 0
          %s908 = sadd.s32 %s33, %s32
          %s909 = scalar_lea.hbm %s5, %s908
          %s911 = sshll.u32 %s870, 4
          %s912 = int_to_ptr.vmem [resolvable:$true] %s911
          %s913 = sshll.u32 %s909, 4
          %s914 = int_to_ptr.hbm [resolvable:$true] %s913
          %916 = dma.vmem_to_hbm [thread:$0]  %s912, 16, %s914, %s868
        $region60: #{tpu_custom_call.1} parent=31 // pred_fallthru
          _
      $region32: #{tpu_custom_call.1} parent=5 // pred_fallthru
        _
      %p917 = scmp.le.s32.totalorder 2, %s22
      // Predicated region
      $region61: #{tpu_custom_call.1} parent=5 // pred_check
        %p918 = pneg %p917
      $region62: #{tpu_custom_call.1} parent=5 // pred_check_branch
        %920 = sbr.rel (%p918) target = $region64
      $region63: #{tpu_custom_call.1} parent=5 // pred_region
        %s921 = ssub.s32 %s22, 2
        // Predicated region
        $region65: #{tpu_custom_call.1} parent=63 // pred_check
          %p922 = pneg %p154
        $region66: #{tpu_custom_call.1} parent=63 // pred_check_branch
          %924 = sbr.rel (%p922) target = $region68
        $region67: #{tpu_custom_call.1} parent=63 // pred_region
          %s925 = sand.u32 %s139, 1
          %s926 = scalar_lea.sflag [#allocation5], %s925
          %s927 = sand.u32 %s139, 1
          %s928 = smul.addr %s927, 64
          %s929 = scalar_lea.vmem [#allocation8], %s928
          %931 = dma.done %s926, 1024
        $region68: #{tpu_custom_call.1} parent=63 // pred_fallthru
          _
        // Predicated region
        $region69: #{tpu_custom_call.1} parent=63 // pred_check
          %p932 = pneg %p182
        $region70: #{tpu_custom_call.1} parent=63 // pred_check_branch
          %934 = sbr.rel (%p932) target = $region72
        $region71: #{tpu_custom_call.1} parent=63 // pred_region
          %s935 = sand.u32 %s28, 1
          %s936 = scalar_lea.sflag [#allocation10], %s935
          %s937 = sand.u32 %s167, 1
          %s938 = scalar_lea.vmem [#allocation9], %s937
          %940 = dma.done %s936, 16
        $region72: #{tpu_custom_call.1} parent=63 // pred_fallthru
          _
        // Predicated region
        $region73: #{tpu_custom_call.1} parent=63 // pred_check
          %p941 = pneg %p210
        $region74: #{tpu_custom_call.1} parent=63 // pred_check_branch
          %943 = sbr.rel (%p941) target = $region76
        $region75: #{tpu_custom_call.1} parent=63 // pred_region
          %s944 = sand.u32 %s28, 1
          %s945 = scalar_lea.sflag [#allocation10], %s944
          %s946 = sand.u32 %s195, 1
          %s947 = scalar_lea.vmem [#allocation11], %s946
          %949 = dma.done %s945, 16
        $region76: #{tpu_custom_call.1} parent=63 // pred_fallthru
          _
      $region64: #{tpu_custom_call.1} parent=5 // pred_fallthru
        _
    $region6: #{tpu_custom_call.1} parent=1 // loop_footer
      %s26 = sadd.s32 1, %s22
    $region7: #{tpu_custom_call.1} parent=1 // loop_footer_branch
      %21 = sbr.rel target = $region3
    $region8: #{tpu_custom_call.1} parent=1 // loop_exit
      _
    %950 = vsyncpa [#allocation4], 1
    %s951 = scalar_lea.sflag [#allocation4], 1
    %952 = vsyncpa %s951, 1
    %953 = vsyncpa [#allocation7], 1
    %954 = vsyncpa [#allocation5], 1
    %s955 = scalar_lea.sflag [#allocation5], 1
    %956 = vsyncpa %s955, 1
    %957 = vsyncpa [#allocation10], 1
    %s958 = scalar_lea.sflag [#allocation10], 1
    %959 = vsyncpa %s958, 1

</llo_original>
